<compile_context>
chip_gen: v5e
topology: v5e:2x2
jax: 0.10.0
libtpu: 0.0.40
codegen_flags: <defaults>
</compile_context>

<pallas_src>
import functools

import jax
import jax.numpy as jnp
import numpy as np
from jax.experimental import pallas as pl
from jax.experimental.pallas import tpu as pltpu


def _round_up(x, m):
    return (x + m - 1) // m * m


# ---------------------------------------------------------------------------
# Pallas kernel
# ---------------------------------------------------------------------------
def _break_relu_kernel(x_ref, o_ref, *, h):
    """y = x if x > 0 else -h   (nn.Threshold(0, -h)), whole tile on the VPU."""
    x = x_ref[...]
    o_ref[...] = jnp.where(x > 0, x, jnp.asarray(-h, dtype=x.dtype))


# ---------------------------------------------------------------------------
# Wrapper
# ---------------------------------------------------------------------------
def break_relu(x, h, *, block_rows=512):
    """Apply breakReLU elementwise to an arbitrarily-shaped array via Pallas."""
    orig_shape = x.shape
    dtype = x.dtype
    n = x.size
    flat = x.reshape(-1)

    # Lane-dense width: a multiple of 128, grown while the data is big enough
    # to fill at least 8 sublanes per row block (keeps stores full-width).
    lanes = 128
    while lanes < 2048 and lanes * 2 * 8 <= max(n, 1024):
        lanes *= 2

    rows = pl.cdiv(n, lanes)
    # Row tile: multiple of 8, capped so a double-buffered in+out pair stays
    # far below the scoped VMEM limit even on v7x (512*2048*4B*4bufs = 16 MiB).
    tm = min(block_rows, _round_up(rows, 8))
    rows_p = _round_up(rows, tm)

    pad = rows_p * lanes - n
    if pad:
        flat = jnp.concatenate([flat, jnp.zeros((pad,), dtype)])
    x2d = flat.reshape(rows_p, lanes)

    out = pl.pallas_call(
        functools.partial(_break_relu_kernel, h=float(h)),
        out_shape=jax.ShapeDtypeStruct((rows_p, lanes), dtype),
        grid=(rows_p // tm,),
        in_specs=[pl.BlockSpec((tm, lanes), lambda i: (i, 0))],
        out_specs=pl.BlockSpec((tm, lanes), lambda i: (i, 0)),
        compiler_params=pltpu.CompilerParams(
            dimension_semantics=("parallel",),
            vmem_limit_bytes=64 * 1024 * 1024,
        ),
    )(x2d)

    out_flat = out.reshape(-1)
    if pad:
        out_flat = out_flat[:n]
    return out_flat.reshape(orig_shape)


# ---------------------------------------------------------------------------
# Reference (pure JAX) — mirrors torch.nn.Threshold(0, -h)
# ---------------------------------------------------------------------------
def reference_break_relu(x, h):
    return jnp.where(x > 0, x, jnp.asarray(-h, dtype=x.dtype))


if __name__ == "__main__":
    key = jax.random.PRNGKey(0)
    h = 2.0

    # Module is shape-agnostic elementwise; use a small NCHW-like tensor.
    x = jax.random.normal(key, (2, 4, 16, 16), jnp.float32)

    fwd = jax.jit(functools.partial(break_relu, h=h))
    out = jax.block_until_ready(fwd(x))

    ref = jax.block_until_ready(reference_break_relu(x, h))

    assert out.shape == x.shape, out.shape
    assert np.all(np.isfinite(np.asarray(out)))
    assert np.allclose(np.asarray(out), np.asarray(ref), atol=1e-6, rtol=1e-6), (
        np.max(np.abs(np.asarray(out) - np.asarray(ref))))

    print("KERNEL_OK")
</pallas_src>

<mosaic_0001>
module attributes {stable_mosaic.version = 11 : i64} {
  func.func @_break_relu_kernel(%arg0: i32, %arg1: memref<8x256xf32, #tpu.memory_space<vmem>>, %arg2: memref<8x256xf32, #tpu.memory_space<vmem>>) attributes {dimension_semantics = [#tpu.dimension_semantics<parallel>], iteration_bounds = array<i64: 1>, scalar_prefetch = 0 : i64, scratch_operands = 0 : i64, tpu.core_type = #tpu.core_type<tc>, window_params = [{transform_indices = @transform_0, window_bounds = array<i64: 8, 256>}, {transform_indices = @transform_1, window_bounds = array<i64: 8, 256>}]} {
    %c0 = arith.constant 0 : index
    %c0_0 = arith.constant 0 : index
    %0 = vector.load %arg1[%c0, %c0_0] : memref<8x256xf32, #tpu.memory_space<vmem>>, vector<8x256xf32>
    %cst = arith.constant 0.000000e+00 : f32
    %1 = vector.broadcast %cst : f32 to vector<8x256xf32>
    %2 = arith.cmpf ogt, %0, %1 : vector<8x256xf32>
    %cst_1 = arith.constant -2.000000e+00 : f32
    %3 = vector.broadcast %cst_1 : f32 to vector<8x256xf32>
    %4 = arith.select %2, %0, %3 : vector<8x256xi1>, vector<8x256xf32>
    %c0_2 = arith.constant 0 : index
    %c0_3 = arith.constant 0 : index
    %5 = vector.load %arg2[%c0_2, %c0_3] : memref<8x256xf32, #tpu.memory_space<vmem>>, vector<8x256xf32>
    tpu.vector_store %arg2[%c0_2, %c0_3], %4 {strides = array<i32>} : memref<8x256xf32, #tpu.memory_space<vmem>>, vector<8x256xf32>,
    return
  }
  func.func @transform_0(%arg0: i32) -> (i32, i32) {
    %c0_i32 = arith.constant 0 : i32
    %c0_i32_0 = arith.constant 0 : i32
    return %arg0, %c0_i32 : i32, i32
  }
  func.func @transform_1(%arg0: i32) -> (i32, i32) {
    %c0_i32 = arith.constant 0 : i32
    %c0_i32_0 = arith.constant 0 : i32
    return %arg0, %c0_i32 : i32, i32
  }
}

</mosaic_0001>

<llo_original>
// kernel: break_relu.1
$region0: #{break_relu.1}
  #allocation0 [shape = 'u32[]', space=smem, size = 0x4, offset = 0x4, fixed_abs, tag = 'smem constant byte address 0x4 - core index']
  #allocation1 [shape = 'u32[72,128]{1,0:T(1,128)}', space=vmem, size = 0x9000, scoped, tag = 'internal scratch']
  %s0 = inlined_call_operand.vmem [shape: f32[8,256], index: 0, kind: input, shape index: {}]
  %s1 = inlined_call_operand.vmem [shape: f32[8,256], index: 1, kind: output, shape index: {}]
  %s2 = sld [smem:[#allocation0]]
  $region14: #{break_relu.1} parent=0
    _
  %s4 = ssub.s32 1, %s2
  %s5 = scalar_select 0, %s4, %s2
  // Predicated region
  $region2: #{break_relu.1} parent=0 // pred_check
    _
  $region3: #{break_relu.1} parent=0 // pred_check_branch
    %7 = sbr.rel (0) target = $region5
  $region4: #{break_relu.1} parent=0 // pred_region
    _
  $region5: #{break_relu.1} parent=0 // pred_fallthru
    _
  %v8 = vld [vmem:[%s0] sm:$0xff]
  %v9 = vld [vmem:[%s0 + $0x8] sm:$0xff]
  %vm10 = vcmp.gt.f32.partialorder %v8, 0.0
  %vm11 = vcmp.gt.f32.partialorder %v9, 0.0
  %v12 = vsel %vm10, %v8, -2.0
  %v13 = vsel %vm11, %v9, -2.0
  %14 = vst [vmem:[%s1] sm:$0xff] %v12
  %15 = vst [vmem:[%s1 + $0x8] sm:$0xff] %v13
  // Predicated region
  $region6: #{break_relu.1} parent=0 // pred_check
    _
  $region7: #{break_relu.1} parent=0 // pred_check_branch
    %17 = sbr.rel (0) target = $region9
  $region8: #{break_relu.1} parent=0 // pred_region
    _
  $region9: #{break_relu.1} parent=0 // pred_fallthru
    _
  // Predicated region
  $region10: #{break_relu.1} parent=0 // pred_check
    _
  $region11: #{break_relu.1} parent=0 // pred_check_branch
    %19 = sbr.rel (0) target = $region13
  $region12: #{break_relu.1} parent=0 // pred_region
    _
  $region13: #{break_relu.1} parent=0 // pred_fallthru
    _

</llo_original>
